<compile_context>
chip_gen: v5e
topology: v5e:2x2
jax: 0.10.0
libtpu: 0.0.40
codegen_flags: <defaults>
</compile_context>

<pallas_src>
import functools

import jax
import jax.numpy as jnp
from jax.experimental import pallas as pl
from jax.experimental.pallas import tpu as pltpu


def _round_up(n, m):
    return ((n + m - 1) // m) * m


def vanet_kernel(x_ref, w1_ref, b1_ref, w2_ref, b2_ref, out_ref, *, action_dim):
    # fc1 + ReLU: MXU matmul with f32 accumulate, VPU epilogue.
    h = jnp.dot(x_ref[...], w1_ref[...], preferred_element_type=jnp.float32)
    h = jnp.maximum(h + b1_ref[...], 0.0)

    # Fused advantage/value head: lanes [0, action_dim) are A, lane action_dim
    # is V, remaining lanes are exactly zero (zero-padded W2 cols / b2).
    av = jnp.dot(h, w2_ref[...], preferred_element_type=jnp.float32)
    av = av + b2_ref[...]

    # Dueling combine: one lane reduction + one lane extract. Because the
    # padded lanes are exact zeros, sum(av) == sum(A) + V.
    s = jnp.sum(av, axis=-1, keepdims=True)              # sum(A) + V
    v = av[:, action_dim:action_dim + 1]                 # V lane
    mean_a = (s - v) * (1.0 / action_dim)                # mean(A), padding-free

    # Narrow store: only the real Q columns (masked vst is far cheaper than a
    # 64x-padded full-lane HBM writeback for small action_dim).
    out_ref[...] = (av[:, :action_dim] + v - mean_a).astype(out_ref.dtype)


def _choose_batch_tile(b8, tile_b):
    tb = min(tile_b, b8)
    # Guarantee >= 2 grid steps whenever there is enough work so the "parallel"
    # batch axis can shard across both v7x TensorCores (harmless on v5e/v6e).
    if b8 >= 16:
        tb = min(tb, _round_up((b8 + 1) // 2, 8))
    return max(tb, 8)


def vanet_forward(x, w1, b1, w2, b2, action_dim, tile_b=2048):
    """x: (B, state_dim) f32.
    w1: (state_dim, hidden_pad), b1: (1, hidden_pad)
    w2: (hidden_pad, n_pad) fused [A | V | zeros], b2: (1, n_pad)
    Returns Q: (B, action_dim) f32."""
    B, S = x.shape
    H_pad = w1.shape[1]
    N_pad = w2.shape[1]

    # Pad only the ragged batch tail to a sublane multiple (no-op for the
    # common power-of-two batch sizes); never round up to the tile size.
    B8 = _round_up(B, 8)
    if B8 != B:
        x = jnp.pad(x, ((0, B8 - B), (0, 0)))

    tb = _choose_batch_tile(B8, tile_b)
    grid = (pl.cdiv(B8, tb),)

    flops = 2 * B8 * (S * H_pad + H_pad * N_pad)
    bytes_accessed = 4 * (B8 * S + S * H_pad + H_pad + H_pad * N_pad + N_pad
                          + B8 * action_dim)

    out = pl.pallas_call(
        functools.partial(vanet_kernel, action_dim=action_dim),
        out_shape=jax.ShapeDtypeStruct((B8, action_dim), jnp.float32),
        grid=grid,
        in_specs=[
            pl.BlockSpec((tb, S), lambda i: (i, 0)),         # x: tiled on batch
            pl.BlockSpec((S, H_pad), lambda i: (0, 0)),      # W1: VMEM-resident
            pl.BlockSpec((1, H_pad), lambda i: (0, 0)),      # b1: resident
            pl.BlockSpec((H_pad, N_pad), lambda i: (0, 0)),  # W2 fused: resident
            pl.BlockSpec((1, N_pad), lambda i: (0, 0)),      # b2 fused: resident
        ],
        out_specs=pl.BlockSpec((tb, action_dim), lambda i: (i, 0)),  # narrow Q
        compiler_params=pltpu.CompilerParams(
            dimension_semantics=("parallel",)),
        cost_estimate=pl.CostEstimate(
            flops=flops, transcendentals=0, bytes_accessed=bytes_accessed),
    )(x, w1, b1, w2, b2)

    if B8 != B:
        out = out[:B]  # tiny tail trim; fuses into the consumer's jit
    return out


def init_params(key, state_dim, hidden_dim, action_dim):
    """PyTorch nn.Linear-style init (uniform +/- 1/sqrt(fan_in)), weights
    stored as (in, out). Returns the three raw layers (fc1, fc_A, fc_V)."""
    k1, k2, k3, k4, k5, k6 = jax.random.split(key, 6)
    bnd1 = 1.0 / jnp.sqrt(state_dim)
    bnd2 = 1.0 / jnp.sqrt(hidden_dim)
    w1 = jax.random.uniform(k1, (state_dim, hidden_dim), jnp.float32, -bnd1, bnd1)
    b1 = jax.random.uniform(k2, (1, hidden_dim), jnp.float32, -bnd1, bnd1)
    wA = jax.random.uniform(k3, (hidden_dim, action_dim), jnp.float32, -bnd2, bnd2)
    bA = jax.random.uniform(k4, (1, action_dim), jnp.float32, -bnd2, bnd2)
    wV = jax.random.uniform(k5, (hidden_dim, 1), jnp.float32, -bnd2, bnd2)
    bV = jax.random.uniform(k6, (1, 1), jnp.float32, -bnd2, bnd2)
    return w1, b1, wA, bA, wV, bV


def pad_and_fuse_params(w1, b1, wA, bA, wV, bV):
    """Pad hidden to a multiple of 128 lanes, fuse A/V heads into one weight
    padded to 128 output lanes: columns = [A (action_dim) | V (1) | zeros].
    One-time parameter prep; keeps both matmuls lane-dense on the MXU."""
    state_dim, hidden_dim = w1.shape
    action_dim = wA.shape[1]
    H_pad = _round_up(hidden_dim, 128)
    N_pad = _round_up(action_dim + 1, 128)

    w1p = jnp.zeros((state_dim, H_pad), jnp.float32).at[:, :hidden_dim].set(w1)
    b1p = jnp.zeros((1, H_pad), jnp.float32).at[:, :hidden_dim].set(b1)

    w2 = jnp.concatenate([wA, wV], axis=1)                    # (hidden, A+1)
    b2 = jnp.concatenate([bA, bV], axis=1)                    # (1, A+1)
    w2p = jnp.zeros((H_pad, N_pad), jnp.float32).at[:hidden_dim, :action_dim + 1].set(w2)
    b2p = jnp.zeros((1, N_pad), jnp.float32).at[:, :action_dim + 1].set(b2)
    return w1p, b1p, w2p, b2p


if __name__ == "__main__":
    # Small shapes implied by the module (CartPole-like dueling DQN).
    batch, state_dim, hidden_dim, action_dim = 8, 4, 32, 2

    key = jax.random.PRNGKey(0)
    kx, kp = jax.random.split(key)
    x = jax.random.normal(kx, (batch, state_dim), jnp.float32)

    w1, b1, wA, bA, wV, bV = init_params(kp, state_dim, hidden_dim, action_dim)
    w1p, b1p, w2p, b2p = pad_and_fuse_params(w1, b1, wA, bA, wV, bV)

    q = vanet_forward(x, w1p, b1p, w2p, b2p, action_dim)
    q = jax.block_until_ready(q)

    # Pure-JAX reference of the original VAnet forward (unpadded params).
    h = jnp.maximum(x @ w1 + b1, 0.0)
    A = h @ wA + bA
    V = h @ wV + bV
    q_ref = V + A - A.mean(axis=1, keepdims=True)

    assert q.shape == (batch, action_dim)
    assert jnp.allclose(q, q_ref, atol=1e-5, rtol=1e-5)

    print("KERNEL_OK")
</pallas_src>

<mosaic_0001>
module attributes {stable_mosaic.version = 11 : i64} {
  func.func @vanet_kernel(%arg0: i32, %arg1: memref<8x4xf32, #tpu.memory_space<vmem>>, %arg2: memref<4x128xf32, #tpu.memory_space<vmem>>, %arg3: memref<1x128xf32, #tpu.memory_space<vmem>>, %arg4: memref<128x128xf32, #tpu.memory_space<vmem>>, %arg5: memref<1x128xf32, #tpu.memory_space<vmem>>, %arg6: memref<8x2xf32, #tpu.memory_space<vmem>>) attributes {dimension_semantics = [#tpu.dimension_semantics<parallel>], iteration_bounds = array<i64: 1>, scalar_prefetch = 0 : i64, scratch_operands = 0 : i64, tpu.core_type = #tpu.core_type<tc>, window_params = [{transform_indices = @transform_0, window_bounds = array<i64: 8, 4>}, {pipeline_mode = #tpu.pipeline_mode<synchronous>, transform_indices = @transform_1, window_bounds = array<i64: 4, 128>}, {pipeline_mode = #tpu.pipeline_mode<synchronous>, transform_indices = @transform_2, window_bounds = array<i64: 1, 128>}, {pipeline_mode = #tpu.pipeline_mode<synchronous>, transform_indices = @transform_3, window_bounds = array<i64: 128, 128>}, {pipeline_mode = #tpu.pipeline_mode<synchronous>, transform_indices = @transform_4, window_bounds = array<i64: 1, 128>}, {transform_indices = @transform_5, window_bounds = array<i64: 8, 2>}]} {
    %c0 = arith.constant 0 : index
    %c0_0 = arith.constant 0 : index
    %0 = vector.load %arg1[%c0, %c0_0] : memref<8x4xf32, #tpu.memory_space<vmem>>, vector<8x4xf32>
    %c0_1 = arith.constant 0 : index
    %c0_2 = arith.constant 0 : index
    %1 = vector.load %arg2[%c0_1, %c0_2] : memref<4x128xf32, #tpu.memory_space<vmem>>, vector<4x128xf32>
    %cst = arith.constant dense<0.000000e+00> : vector<8x128xf32>
    %2 = tpu.matmul %0, %1, %cst {dimension_numbers = #tpu.dot_dimension_numbers<[1], [0], [0], [1], [0, 0, 1, 1], [], []>} : vector<8x4xf32>, vector<4x128xf32>, vector<8x128xf32> -> vector<8x128xf32>
    %c0_3 = arith.constant 0 : index
    %c0_4 = arith.constant 0 : index
    %3 = vector.load %arg3[%c0_3, %c0_4] : memref<1x128xf32, #tpu.memory_space<vmem>>, vector<1x128xf32>
    %4 = vector.broadcast %3 : vector<1x128xf32> to vector<8x128xf32>
    %5 = arith.addf %2, %4 : vector<8x128xf32>
    %cst_5 = arith.constant 0.000000e+00 : f32
    %6 = vector.broadcast %cst_5 : f32 to vector<8x128xf32>
    %7 = arith.maximumf %5, %6 : vector<8x128xf32>
    %c0_6 = arith.constant 0 : index
    %c0_7 = arith.constant 0 : index
    %8 = vector.load %arg4[%c0_6, %c0_7] : memref<128x128xf32, #tpu.memory_space<vmem>>, vector<128x128xf32>
    %cst_8 = arith.constant dense<0.000000e+00> : vector<8x128xf32>
    %9 = tpu.matmul %7, %8, %cst_8 {dimension_numbers = #tpu.dot_dimension_numbers<[1], [0], [0], [1], [0, 0, 1, 1], [], []>} : vector<8x128xf32>, vector<128x128xf32>, vector<8x128xf32> -> vector<8x128xf32>
    %c0_9 = arith.constant 0 : index
    %c0_10 = arith.constant 0 : index
    %10 = vector.load %arg5[%c0_9, %c0_10] : memref<1x128xf32, #tpu.memory_space<vmem>>, vector<1x128xf32>
    %11 = vector.broadcast %10 : vector<1x128xf32> to vector<8x128xf32>
    %12 = arith.addf %9, %11 : vector<8x128xf32>
    %cst_11 = arith.constant dense<0.000000e+00> : vector<8xf32>
    %13 = vector.multi_reduction <add>, %12, %cst_11 [1] : vector<8x128xf32> to vector<8xf32>
    %14 = vector.shape_cast %13 : vector<8xf32> to vector<8x1xf32>
    %15 = vector.extract_strided_slice %12 {offsets = [0, 2], sizes = [8, 1], strides = [1, 1]} : vector<8x128xf32> to vector<8x1xf32>
    %16 = arith.subf %14, %15 : vector<8x1xf32>
    %cst_12 = arith.constant 5.000000e-01 : f32
    %17 = vector.broadcast %cst_12 : f32 to vector<8x1xf32>
    %18 = arith.mulf %16, %17 : vector<8x1xf32>
    %19 = vector.extract_strided_slice %12 {offsets = [0, 0], sizes = [8, 2], strides = [1, 1]} : vector<8x128xf32> to vector<8x2xf32>
    %20 = vector.broadcast %15 : vector<8x1xf32> to vector<8x2xf32>
    %21 = arith.addf %19, %20 : vector<8x2xf32>
    %22 = vector.broadcast %18 : vector<8x1xf32> to vector<8x2xf32>
    %23 = arith.subf %21, %22 : vector<8x2xf32>
    %c0_13 = arith.constant 0 : index
    %c0_14 = arith.constant 0 : index
    %24 = vector.load %arg6[%c0_13, %c0_14] : memref<8x2xf32, #tpu.memory_space<vmem>>, vector<8x2xf32>
    tpu.vector_store %arg6[%c0_13, %c0_14], %23 {strides = array<i32>} : memref<8x2xf32, #tpu.memory_space<vmem>>, vector<8x2xf32>,
    return
  }
  func.func @transform_0(%arg0: i32) -> (i32, i32) {
    %c0_i32 = arith.constant 0 : i32
    %c0_i32_0 = arith.constant 0 : i32
    return %arg0, %c0_i32 : i32, i32
  }
  func.func @transform_1(%arg0: i32) -> (i32, i32) {
    %c0_i32 = arith.constant 0 : i32
    %c0_i32_0 = arith.constant 0 : i32
    %c0_i32_1 = arith.constant 0 : i32
    return %c0_i32, %c0_i32_0 : i32, i32
  }
  func.func @transform_2(%arg0: i32) -> (i32, i32) {
    %c0_i32 = arith.constant 0 : i32
    %c0_i32_0 = arith.constant 0 : i32
    %c0_i32_1 = arith.constant 0 : i32
    return %c0_i32, %c0_i32_0 : i32, i32
  }
  func.func @transform_3(%arg0: i32) -> (i32, i32) {
    %c0_i32 = arith.constant 0 : i32
    %c0_i32_0 = arith.constant 0 : i32
    %c0_i32_1 = arith.constant 0 : i32
    return %c0_i32, %c0_i32_0 : i32, i32
  }
  func.func @transform_4(%arg0: i32) -> (i32, i32) {
    %c0_i32 = arith.constant 0 : i32
    %c0_i32_0 = arith.constant 0 : i32
    %c0_i32_1 = arith.constant 0 : i32
    return %c0_i32, %c0_i32_0 : i32, i32
  }
  func.func @transform_5(%arg0: i32) -> (i32, i32) {
    %c0_i32 = arith.constant 0 : i32
    %c0_i32_0 = arith.constant 0 : i32
    return %arg0, %c0_i32 : i32, i32
  }
}

</mosaic_0001>

<llo_original>
// kernel: tpu_custom_call.1
$region0: #{tpu_custom_call.1}
  #allocation0 [shape = 'u32[]', space=smem, size = 0x4, offset = 0x4, fixed_abs, tag = 'smem constant byte address 0x4 - core index']
  #allocation1 [shape = 'u32[72,128]{1,0:T(1,128)}', space=vmem, size = 0x9000, scoped, tag = 'internal scratch']
  %s0 = inlined_call_operand.vmem [shape: f32[8,4], index: 0, kind: input, shape index: {}]
  %s1 = inlined_call_operand.vmem [shape: f32[4,128], index: 1, kind: input, shape index: {}]
  %s2 = inlined_call_operand.vmem [shape: f32[1,128], index: 2, kind: input, shape index: {}]
  %s3 = inlined_call_operand.hbm [shape: f32[128,128], index: 3, kind: input, shape index: {}]
  %s4 = inlined_call_operand.vmem [shape: f32[1,128], index: 4, kind: input, shape index: {}]
  %s5 = inlined_call_operand.vmem [shape: f32[8,2], index: 5, kind: output, shape index: {}]
  %s6 = sld [smem:[#allocation0]]
  $region34: #{tpu_custom_call.1} parent=0
    _
  %s8 = ssub.s32 1, %s6
  %s9 = scalar_select 0, %s8, %s6
  $region1: #{tpu_custom_call.1} parent=0
    #allocation2 [shape = 'u8[65536]{0}', space=vmem, size = 0x10000, scoped, tag = 'input window, operand 3, single buffered']
    #allocation3 [shape = 's32[1]{0}', space=sflag, size = 0x4, scoped, tag = 'scoped memory for tpu_custom_call.1']
    %10 = vsyncpa [#allocation3], 0
    // Predicated region
    $region2: #{tpu_custom_call.1} parent=1 // pred_check
      _
    $region3: #{tpu_custom_call.1} parent=1 // pred_check_branch
      %12 = sbr.rel (0) target = $region5
    $region4: #{tpu_custom_call.1} parent=1 // pred_region
      _
    $region5: #{tpu_custom_call.1} parent=1 // pred_fallthru
      _
    // Predicated region
    $region6: #{tpu_custom_call.1} parent=1 // pred_check
      _
    $region7: #{tpu_custom_call.1} parent=1 // pred_check_branch
      %14 = sbr.rel (0) target = $region9
    $region8: #{tpu_custom_call.1} parent=1 // pred_region
      _
    $region9: #{tpu_custom_call.1} parent=1 // pred_fallthru
      _
    // Predicated region
    $region10: #{tpu_custom_call.1} parent=1 // pred_check
      _
    $region11: #{tpu_custom_call.1} parent=1 // pred_check_branch
      %16 = sbr.rel (0) target = $region13
    $region12: #{tpu_custom_call.1} parent=1 // pred_region
      _
    $region13: #{tpu_custom_call.1} parent=1 // pred_fallthru
      _
    // Predicated region
    $region14: #{tpu_custom_call.1} parent=1 // pred_check
      _
    $region15: #{tpu_custom_call.1} parent=1 // pred_check_branch
      %18 = sbr.rel (0) target = $region17
    $region16: #{tpu_custom_call.1} parent=1 // pred_region
      %20 = vsyncadd [#allocation3], 0
      %s21 = sshll.u32 %s3, 4
      %s22 = int_to_ptr.hbm [resolvable:$true] %s21
      %s23 = sshll.u32 [#allocation2], 4
      %s24 = int_to_ptr.vmem [resolvable:$true] %s23
      %29 = dma.hbm_to_vmem [thread:$0]  %s22, 2048, %s24, [#allocation3], 128, 128, 8
    $region17: #{tpu_custom_call.1} parent=1 // pred_fallthru
      _
    // Predicated region
    $region18: #{tpu_custom_call.1} parent=1 // pred_check
      _
    $region19: #{tpu_custom_call.1} parent=1 // pred_check_branch
      %31 = sbr.rel (0) target = $region21
    $region20: #{tpu_custom_call.1} parent=1 // pred_region
      _
    $region21: #{tpu_custom_call.1} parent=1 // pred_fallthru
      _
    // Predicated region
    $region22: #{tpu_custom_call.1} parent=1 // pred_check
      _
    $region23: #{tpu_custom_call.1} parent=1 // pred_check_branch
      %33 = sbr.rel (0) target = $region25
    $region24: #{tpu_custom_call.1} parent=1 // pred_region
      %35 = dma.done [#allocation3], 2048
    $region25: #{tpu_custom_call.1} parent=1 // pred_fallthru
      _
    %v36 = vld [vmem:[%s0] sm:$0xff]
    %v37 = vld [vmem:[%s1] sm:$0xf]
    %v38 = vld [vmem:[%s2] sm:$0x1]
    %v40 = vperm.slane %v38, 0
    %vm42 = vcmask 31744
    %v44 = vsel %vm42, %v36, 0
    %vm46 = vcmask 1043456
    %v48 = vsel %vm46, %v37, 0
    %50 = vmatpush.msra.mxu0 0.0
    %51 = vmatpush.msra.mxu0 0.0
    %52 = vmatpush.msra.mxu0 0.0
    %53 = vmatpush.msra.mxu0 0.0
    %54 = vmatpush.msra.mxu0 0.0
    %55 = vmatpush.msra.mxu0 0.0
    %56 = vmatpush.msra.mxu0 0.0
    %57 = vmatpush.msra.mxu0 0.0
    %58 = vmatpush.msra.mxu0 0.0
    %59 = vmatpush.msra.mxu0 0.0
    %60 = vmatpush.msra.mxu0 0.0
    %61 = vmatpush.msra.mxu0 0.0
    %62 = vmatpush.msra.mxu0 0.0
    %63 = vmatpush.msra.mxu0 0.0
    %64 = vmatpush.msra.mxu0 0.0
    %65 = vmatpush.msra.mxu0 %v48
    %66 = vmatmul.f32.gmra.mxu0 %v44
    %v67 = vpop.f32.mrf.mxu0
    %v68 = vadd.f32 %v40, %v67
    %69 = vdwg.mxu0
    %v70 = vmax.f32 %v68, 0.0
    %v71 = vld [vmem:[#allocation2] sm:$0xff]
    %v72 = vld [vmem:[#allocation2 + $0x8] sm:$0xff]
    %v73 = vld [vmem:[#allocation2 + $0x10] sm:$0xff]
    %v74 = vld [vmem:[#allocation2 + $0x18] sm:$0xff]
    %v75 = vld [vmem:[#allocation2 + $0x20] sm:$0xff]
    %v76 = vld [vmem:[#allocation2 + $0x28] sm:$0xff]
    %v77 = vld [vmem:[#allocation2 + $0x30] sm:$0xff]
    %v78 = vld [vmem:[#allocation2 + $0x38] sm:$0xff]
    %v79 = vld [vmem:[#allocation2 + $0x40] sm:$0xff]
    %v80 = vld [vmem:[#allocation2 + $0x48] sm:$0xff]
    %v81 = vld [vmem:[#allocation2 + $0x50] sm:$0xff]
    %v82 = vld [vmem:[#allocation2 + $0x58] sm:$0xff]
    %v83 = vld [vmem:[#allocation2 + $0x60] sm:$0xff]
    %v84 = vld [vmem:[#allocation2 + $0x68] sm:$0xff]
    %v85 = vld [vmem:[#allocation2 + $0x70] sm:$0xff]
    %v86 = vld [vmem:[#allocation2 + $0x78] sm:$0xff]
    %v87 = vld [vmem:[%s4] sm:$0x1]
    %v89 = vperm.slane %v87, 0
    %91 = vmatpush.msra.mxu0 %v86
    %92 = vmatpush.msra.mxu0 %v85
    %93 = vmatpush.msra.mxu0 %v84
    %94 = vmatpush.msra.mxu0 %v83
    %95 = vmatpush.msra.mxu0 %v82
    %96 = vmatpush.msra.mxu0 %v81
    %97 = vmatpush.msra.mxu0 %v80
    %98 = vmatpush.msra.mxu0 %v79
    %99 = vmatpush.msra.mxu0 %v78
    %100 = vmatpush.msra.mxu0 %v77
    %101 = vmatpush.msra.mxu0 %v76
    %102 = vmatpush.msra.mxu0 %v75
    %103 = vmatpush.msra.mxu0 %v74
    %104 = vmatpush.msra.mxu0 %v73
    %105 = vmatpush.msra.mxu0 %v72
    %106 = vmatpush.msra.mxu0 %v71
    %107 = vmatmul.f32.gmra.mxu0 %v70
    %v108 = vpop.f32.mrf.mxu0
    %v109 = vadd.f32 %v89, %v108
    %110 = vdwg.mxu0
    %111 = vadd.xlane.f32.xlu0 %v109
    %v112 = vpop.xlane.xlu0 %111
    %v113 = vsub.f32 %v112, %v109
    %v114 = vmul.f32 %v113, 0.5
    %116 = vset.pattern.permute.xlu0 2
    %117 = vperm.xlu0 %116, %v109
    %v118 = vpop.permute.xlu0 %117
    %v120 = vadd.f32 %v109, %v118
    %122 = vset.pattern.permute.xlu0 2
    %123 = vperm.xlu0 %122, %v114
    %v124 = vpop.permute.xlu0 %123
    %v126 = vsub.f32 %v120, %v124
    %vm127 = vcmask 15360
    %128 = vst.msk [vmem:[%s5] sm:$0xff] %vm127, %v126
    // Predicated region
    $region26: #{tpu_custom_call.1} parent=1 // pred_check
      _
    $region27: #{tpu_custom_call.1} parent=1 // pred_check_branch
      %130 = sbr.rel (0) target = $region29
    $region28: #{tpu_custom_call.1} parent=1 // pred_region
      _
    $region29: #{tpu_custom_call.1} parent=1 // pred_fallthru
      _
    // Predicated region
    $region30: #{tpu_custom_call.1} parent=1 // pred_check
      _
    $region31: #{tpu_custom_call.1} parent=1 // pred_check_branch
      %132 = sbr.rel (0) target = $region33
    $region32: #{tpu_custom_call.1} parent=1 // pred_region
      _
    $region33: #{tpu_custom_call.1} parent=1 // pred_fallthru
      _
    %133 = vsyncpa [#allocation3], 1

</llo_original>
